<compile_context>
chip_gen: v7x
topology: tpu7x:2x2x1
jax: 0.10.0
libtpu: 0.0.40
codegen_flags: <defaults>
</compile_context>

<pallas_src>
import functools

import jax
import jax.numpy as jnp
from jax import lax
from jax.experimental import pallas as pl
from jax.experimental.pallas import tpu as pltpu

_LANE = 128


def _ceil_to(v, m):
    return -(-v // m) * m


def _fm_kernel_nomask(x_ref, o_ref, sum_acc, sq_acc, *, seq_len, seq_tile, need_tail):
    si = pl.program_id(2)

    @pl.when(si == 0)
    def _():
        sum_acc[...] = jnp.zeros_like(sum_acc)
        sq_acc[...] = jnp.zeros_like(sq_acc)

    x = x_ref[...].astype(jnp.float32)
    if need_tail:  # static: only emitted when S % TS != 0
        pos = si * seq_tile + lax.broadcasted_iota(jnp.int32, (1, seq_tile, 1), 1)
        x = jnp.where(pos >= seq_len, 0.0, x)
    sum_acc[...] += jnp.sum(x, axis=1)
    sq_acc[...] += jnp.sum(x * x, axis=1)

    @pl.when(si == pl.num_programs(2) - 1)
    def _():
        s = sum_acc[...]
        o_ref[...] = (0.5 * (s * s - sq_acc[...])).astype(o_ref.dtype)


def _fm_kernel_masked(x_ref, m_ref, o_ref, sum_acc, sq_acc, *, seq_len, seq_tile, need_tail):
    si = pl.program_id(2)

    @pl.when(si == 0)
    def _():
        sum_acc[...] = jnp.zeros_like(sum_acc)
        sq_acc[...] = jnp.zeros_like(sq_acc)

    x = x_ref[...].astype(jnp.float32)
    drop = m_ref[...] != 0                       # (TB, TS, 1): sublane-aligned with x
    if need_tail:
        pos = si * seq_tile + lax.broadcasted_iota(jnp.int32, (1, seq_tile, 1), 1)
        drop = jnp.logical_or(drop, pos >= seq_len)
    xm = jnp.where(drop, 0.0, x)                 # NaN-safe masked_fill(mask, 0)
    # TODO(synk): if a v7x bundle dump shows the VALU slot saturating, offload the
    # sequence reduction to the (idle) MXU via einsum('bs,bsd->bd', keep, x).
    sum_acc[...] += jnp.sum(xm, axis=1)
    sq_acc[...] += jnp.sum(xm * xm, axis=1)

    @pl.when(si == pl.num_programs(2) - 1)
    def _():
        s = sum_acc[...]
        o_ref[...] = (0.5 * (s * s - sq_acc[...])).astype(o_ref.dtype)


def _pick_tiles(B, S, D, itemsize, masked, per_buf_budget):
    """Choose (TB, TS, TD) honoring the (sublane, 128) block constraints."""
    sub = {4: 8, 2: 16, 1: 32}.get(itemsize, 8)  # sublane multiple for the dtype

    def buf_bytes(tb, ts, td):
        # mask tile lane-pads its size-1 minor dim to a full 128-lane row.
        lanes = _ceil_to(td, _LANE) + (_LANE if masked else 0)
        return tb * _ceil_to(ts, sub) * lanes * itemsize

    TB = 8 if B >= 8 else B
    TD = D

    # Large-D safety: if even a minimal-TS tile overflows the budget, tile D.
    min_ts = min(S, sub)
    if buf_bytes(TB, min_ts, TD) > per_buf_budget and D % _LANE == 0:
        td = per_buf_budget // (TB * _ceil_to(min_ts, sub) * itemsize)
        td -= _LANE if masked else 0
        TD = min(D, max(_LANE, (td // _LANE) * _LANE))

    # Small-batch megacore help (v7x, 2 TCs): guarantee >= 2 parallel grid steps.
    if pl.cdiv(B, TB) == 1 and TD == D and D % (2 * _LANE) == 0:
        TD = D // 2

    # Sequence tile: whole S if it fits, else the largest sublane multiple.
    if buf_bytes(TB, S, TD) <= per_buf_budget:
        TS = S
    else:
        denom = TB * (_ceil_to(TD, _LANE) + (_LANE if masked else 0)) * itemsize
        ts = per_buf_budget // denom
        TS = min(S, max(sub, (ts // sub) * sub))

    # Short sequences: grow TB (multiples of 8) to amortize per-step overhead,
    # keeping >= 2 batch blocks so both v7x TensorCores have work.
    if TS == S and TD == D and B >= 16:
        per_row = buf_bytes(1, S, TD)
        tb_fit = max(8, (per_buf_budget // max(per_row, 1)) // 8 * 8)
        tb_cap = max(8, (B // 2) // 8 * 8)
        TB = min(tb_fit, tb_cap, (B // 8) * 8)

    return TB, TS, TD


def fm_pooling(x, x_mask=None, *, _force_tiles=None):
    """FMPooling forward.  x: (B, S, D); x_mask: optional (B, S), True/1 = mask out."""
    B, S, D = x.shape
    itemsize = jnp.dtype(x.dtype).itemsize
    masked = x_mask is not None
    sub = {4: 8, 2: 16, 1: 32}.get(itemsize, 8)

    # ---- generation-aware VMEM budgets --------------------------------------
    try:
        vmem_cap = int(pltpu.get_tpu_info().vmem_capacity_bytes)
    except Exception:
        vmem_cap = 64 << 20                       # conservative (v7x-sized) fallback
    if vmem_cap >= (96 << 20):                    # v5e / v6e: 128 MiB physical VMEM
        per_buf_budget = 14 << 20
        vmem_soft_cap = 96 << 20
    else:                                         # v7x: 64 MiB physical VMEM
        per_buf_budget = 12 << 20
        vmem_soft_cap = 48 << 20

    if _force_tiles is not None:
        TB, TS, TD = _force_tiles
    else:
        TB, TS, TD = _pick_tiles(B, S, D, itemsize, masked, per_buf_budget)

    grid = (pl.cdiv(B, TB), pl.cdiv(D, TD), pl.cdiv(S, TS))
    need_tail = (S % TS) != 0

    # ---- VMEM estimate for the compiler --------------------------------------
    lanes = _ceil_to(TD, _LANE) + (_LANE if masked else 0)
    step_bytes = TB * _ceil_to(TS, sub) * lanes * itemsize
    est = 2 * step_bytes                            # double-buffered input tiles
    est += 2 * TB * _ceil_to(TD, _LANE) * itemsize  # double-buffered output tiles
    est += 2 * TB * _ceil_to(TD, _LANE) * 4         # two f32 accumulators
    vmem_limit = int(min(vmem_soft_cap, max(32 << 20, est + est // 2 + (2 << 20))))

    compiler_params = pltpu.CompilerParams(
        dimension_semantics=("parallel", "parallel", "arbitrary"),
        vmem_limit_bytes=vmem_limit,
    )

    out_shape = jax.ShapeDtypeStruct((B, D), x.dtype)
    x_spec = pl.BlockSpec((TB, TS, TD), lambda bi, di, si: (bi, si, di))
    out_spec = pl.BlockSpec((TB, TD), lambda bi, di, si: (bi, di))
    scratch = [pltpu.VMEM((TB, TD), jnp.float32),
               pltpu.VMEM((TB, TD), jnp.float32)]

    # TODO(synk): for D < 128, fold 128//D sequence positions into the lane dim
    # (lane-dense tiles + roll-based finalize) to recover full VPU width.
    if not masked:
        kernel = functools.partial(_fm_kernel_nomask,
                                   seq_len=S, seq_tile=TS, need_tail=need_tail)
        return pl.pallas_call(
            kernel,
            out_shape=out_shape,
            grid_spec=pltpu.PrefetchScalarGridSpec(
                num_scalar_prefetch=0,
                grid=grid,
                in_specs=[x_spec],
                out_specs=out_spec,
                scratch_shapes=scratch,
            ),
            compiler_params=compiler_params,
        )(x)

    # (B, S, 1) 0/1 mask in x.dtype: tiny HBM traffic, sublane-aligned with x.
    m = x_mask[..., None].astype(x.dtype)
    m_spec = pl.BlockSpec((TB, TS, 1), lambda bi, di, si: (bi, si, 0))
    kernel = functools.partial(_fm_kernel_masked,
                               seq_len=S, seq_tile=TS, need_tail=need_tail)
    return pl.pallas_call(
        kernel,
        out_shape=out_shape,
        grid_spec=pltpu.PrefetchScalarGridSpec(
            num_scalar_prefetch=0,
            grid=grid,
            in_specs=[x_spec, m_spec],
            out_specs=out_spec,
            scratch_shapes=scratch,
        ),
        compiler_params=compiler_params,
    )(x, m)


def _reference(x, x_mask=None):
    if x_mask is not None:
        x = jnp.where(x_mask[:, :, None], 0.0, x)
    s = jnp.sum(x, axis=1)
    return 0.5 * (s * s - jnp.sum(x * x, axis=1))


if __name__ == "__main__":
    key = jax.random.PRNGKey(0)
    k1, k2, k3 = jax.random.split(key, 3)

    # Small case (B < 8, single grid step), masked and unmasked.
    B, S, D = 2, 8, 32
    x = jax.random.normal(k1, (B, S, D), dtype=jnp.float32)
    x_mask = jnp.zeros((B, S), dtype=bool).at[1, 5:].set(True)
    out_m = fm_pooling(x, x_mask)
    out_p = fm_pooling(x)
    jax.block_until_ready((out_m, out_p))
    assert out_m.shape == (B, D)
    assert jnp.allclose(out_m, _reference(x, x_mask), atol=1e-4, rtol=1e-5)
    assert jnp.allclose(out_p, _reference(x), atol=1e-4, rtol=1e-5)

    # TB = 8 path (full sublane-group output blocks).
    B2, S2, D2 = 8, 16, 32
    x2 = jax.random.normal(k2, (B2, S2, D2), dtype=jnp.float32)
    m2 = jnp.zeros((B2, S2), dtype=bool).at[:, 12:].set(True)
    out2 = fm_pooling(x2, m2)
    jax.block_until_ready(out2)
    assert out2.shape == (B2, D2)
    assert jnp.allclose(out2, _reference(x2, m2), atol=1e-4, rtol=1e-5)

    # Unpadded tails: partial batch block + partial sequence blocks (forced tiles).
    B3, S3, D3 = 10, 20, 128
    x3 = jax.random.normal(k3, (B3, S3, D3), dtype=jnp.float32)
    m3 = (jnp.zeros((B3, S3), dtype=bool)
          .at[:, 17:].set(True)
          .at[3, :5].set(True))
    out3m = fm_pooling(x3, m3, _force_tiles=(8, 8, 128))
    out3p = fm_pooling(x3, _force_tiles=(8, 8, 128))
    jax.block_until_ready((out3m, out3p))
    assert jnp.allclose(out3m, _reference(x3, m3), atol=1e-4, rtol=1e-5)
    assert jnp.allclose(out3p, _reference(x3), atol=1e-4, rtol=1e-5)

    print("KERNEL_OK")
</pallas_src>

<mosaic_0001>
module attributes {stable_mosaic.version = 11 : i64} {
  func.func @_fm_kernel_masked(%arg0: i32, %arg1: i32, %arg2: i32, %arg3: memref<2x8x32xf32, #tpu.memory_space<vmem>>, %arg4: memref<2x8x1xf32, #tpu.memory_space<vmem>>, %arg5: memref<2x32xf32, #tpu.memory_space<vmem>>, %arg6: memref<2x32xf32, #tpu.memory_space<vmem>>, %arg7: memref<2x32xf32, #tpu.memory_space<vmem>>) attributes {dimension_semantics = [#tpu.dimension_semantics<parallel>, #tpu.dimension_semantics<parallel>, #tpu.dimension_semantics<arbitrary>], iteration_bounds = array<i64: 1, 1, 1>, scalar_prefetch = 0 : i64, scratch_operands = 2 : i64, tpu.core_type = #tpu.core_type<tc>, window_params = [{transform_indices = @transform_0, window_bounds = array<i64: 2, 8, 32>}, {transform_indices = @transform_1, window_bounds = array<i64: 2, 8, 1>}, {transform_indices = @transform_2, window_bounds = array<i64: 2, 32>}]} {
    %c0_i32 = arith.constant 0 : i32
    %0 = arith.cmpi eq, %arg2, %c0_i32 : i32
    %1 = arith.extui %0 : i1 to i32
    %c0_i32_0 = arith.constant 0 : i32
    %2 = arith.cmpi ne, %1, %c0_i32_0 : i32
    scf.if %2 {
      %cst_19 = arith.constant 0.000000e+00 : f32
      %23 = vector.broadcast %cst_19 : f32 to vector<2x32xf32>
      %c0_20 = arith.constant 0 : index
      %c0_21 = arith.constant 0 : index
      %24 = vector.load %arg6[%c0_20, %c0_21] : memref<2x32xf32, #tpu.memory_space<vmem>>, vector<2x32xf32>
      tpu.vector_store %arg6[%c0_20, %c0_21], %23 {strides = array<i32>} : memref<2x32xf32, #tpu.memory_space<vmem>>, vector<2x32xf32>,
      %cst_22 = arith.constant 0.000000e+00 : f32
      %25 = vector.broadcast %cst_22 : f32 to vector<2x32xf32>
      %c0_23 = arith.constant 0 : index
      %c0_24 = arith.constant 0 : index
      %26 = vector.load %arg7[%c0_23, %c0_24] : memref<2x32xf32, #tpu.memory_space<vmem>>, vector<2x32xf32>
      tpu.vector_store %arg7[%c0_23, %c0_24], %25 {strides = array<i32>} : memref<2x32xf32, #tpu.memory_space<vmem>>, vector<2x32xf32>,
    } else {
    }
    %c0 = arith.constant 0 : index
    %c0_1 = arith.constant 0 : index
    %c0_2 = arith.constant 0 : index
    %3 = vector.load %arg3[%c0, %c0_1, %c0_2] : memref<2x8x32xf32, #tpu.memory_space<vmem>>, vector<2x8x32xf32>
    %c0_3 = arith.constant 0 : index
    %c0_4 = arith.constant 0 : index
    %c0_5 = arith.constant 0 : index
    %4 = vector.load %arg4[%c0_3, %c0_4, %c0_5] : memref<2x8x1xf32, #tpu.memory_space<vmem>>, vector<2x8x1xf32>
    %cst = arith.constant 0.000000e+00 : f32
    %5 = vector.broadcast %cst : f32 to vector<2x8x1xf32>
    %6 = arith.cmpf one, %4, %5 : vector<2x8x1xf32>
    %cst_6 = arith.constant 0.000000e+00 : f32
    %7 = vector.shape_cast %6 : vector<2x8x1xi1> to vector<2x8x1xi1>
    %8 = vector.broadcast %7 : vector<2x8x1xi1> to vector<2x8x32xi1>
    %9 = vector.broadcast %cst_6 : f32 to vector<2x8x32xf32>
    %10 = arith.select %8, %9, %3 : vector<2x8x32xi1>, vector<2x8x32xf32>
    %c0_7 = arith.constant 0 : index
    %c0_8 = arith.constant 0 : index
    %11 = vector.load %arg6[%c0_7, %c0_8] : memref<2x32xf32, #tpu.memory_space<vmem>>, vector<2x32xf32>
    %cst_9 = arith.constant dense<0.000000e+00> : vector<2x32xf32>
    %12 = vector.multi_reduction <add>, %10, %cst_9 [1] : vector<2x8x32xf32> to vector<2x32xf32>
    %13 = arith.addf %11, %12 : vector<2x32xf32>
    %c0_10 = arith.constant 0 : index
    %c0_11 = arith.constant 0 : index
    %14 = vector.load %arg6[%c0_10, %c0_11] : memref<2x32xf32, #tpu.memory_space<vmem>>, vector<2x32xf32>
    tpu.vector_store %arg6[%c0_10, %c0_11], %13 {strides = array<i32>} : memref<2x32xf32, #tpu.memory_space<vmem>>, vector<2x32xf32>,
    %c0_12 = arith.constant 0 : index
    %c0_13 = arith.constant 0 : index
    %15 = vector.load %arg7[%c0_12, %c0_13] : memref<2x32xf32, #tpu.memory_space<vmem>>, vector<2x32xf32>
    %16 = arith.mulf %10, %10 : vector<2x8x32xf32>
    %cst_14 = arith.constant dense<0.000000e+00> : vector<2x32xf32>
    %17 = vector.multi_reduction <add>, %16, %cst_14 [1] : vector<2x8x32xf32> to vector<2x32xf32>
    %18 = arith.addf %15, %17 : vector<2x32xf32>
    %c0_15 = arith.constant 0 : index
    %c0_16 = arith.constant 0 : index
    %19 = vector.load %arg7[%c0_15, %c0_16] : memref<2x32xf32, #tpu.memory_space<vmem>>, vector<2x32xf32>
    tpu.vector_store %arg7[%c0_15, %c0_16], %18 {strides = array<i32>} : memref<2x32xf32, #tpu.memory_space<vmem>>, vector<2x32xf32>,
    %c0_i32_17 = arith.constant 0 : i32
    %20 = arith.cmpi eq, %arg2, %c0_i32_17 : i32
    %21 = arith.extui %20 : i1 to i32
    %c0_i32_18 = arith.constant 0 : i32
    %22 = arith.cmpi ne, %21, %c0_i32_18 : i32
    scf.if %22 {
      %c0_19 = arith.constant 0 : index
      %c0_20 = arith.constant 0 : index
      %23 = vector.load %arg6[%c0_19, %c0_20] : memref<2x32xf32, #tpu.memory_space<vmem>>, vector<2x32xf32>
      %24 = arith.mulf %23, %23 : vector<2x32xf32>
      %c0_21 = arith.constant 0 : index
      %c0_22 = arith.constant 0 : index
      %25 = vector.load %arg7[%c0_21, %c0_22] : memref<2x32xf32, #tpu.memory_space<vmem>>, vector<2x32xf32>
      %26 = arith.subf %24, %25 : vector<2x32xf32>
      %cst_23 = arith.constant 5.000000e-01 : f32
      %27 = vector.broadcast %cst_23 : f32 to vector<2x32xf32>
      %28 = arith.mulf %27, %26 : vector<2x32xf32>
      %c0_24 = arith.constant 0 : index
      %c0_25 = arith.constant 0 : index
      %29 = vector.load %arg5[%c0_24, %c0_25] : memref<2x32xf32, #tpu.memory_space<vmem>>, vector<2x32xf32>
      tpu.vector_store %arg5[%c0_24, %c0_25], %28 {strides = array<i32>} : memref<2x32xf32, #tpu.memory_space<vmem>>, vector<2x32xf32>,
    } else {
    }
    return
  }
  func.func @transform_0(%arg0: i32, %arg1: i32, %arg2: i32) -> (i32, i32, i32) {
    %c0_i32 = arith.constant 0 : i32
    return %arg0, %arg2, %arg1 : i32, i32, i32
  }
  func.func @transform_1(%arg0: i32, %arg1: i32, %arg2: i32) -> (i32, i32, i32) {
    %c0_i32 = arith.constant 0 : i32
    %c0_i32_0 = arith.constant 0 : i32
    return %arg0, %arg2, %c0_i32 : i32, i32, i32
  }
  func.func @transform_2(%arg0: i32, %arg1: i32, %arg2: i32) -> (i32, i32) {
    %c0_i32 = arith.constant 0 : i32
    return %arg0, %arg1 : i32, i32
  }
}

</mosaic_0001>

<llo_original>
// kernel: tpu_custom_call.1
$region0: #{tpu_custom_call.1}
  #allocation0 [shape = 'u32[]', space=smem, size = 0x4, offset = 0x4, fixed_abs, tag = 'smem constant byte address 0x4 - core index']
  #allocation1 [shape = 'u32[144,128]{1,0:T(1,128)}', space=vmem, size = 0x12000, scoped, tag = 'internal scratch']
  #allocation2 [shape = 'f32[2,32]{1,0:T(2,128)}', space=vmem, size = 0x400, scoped, tag = 'scratch operand']
  #allocation3 [shape = 'f32[2,32]{1,0:T(2,128)}', space=vmem, size = 0x400, scoped, tag = 'scratch operand']
  %s0 = inlined_call_operand.vmem [shape: f32[2,8,32], index: 0, kind: input, shape index: {}]
  %s1 = inlined_call_operand.vmem [shape: f32[2,8,1], index: 1, kind: input, shape index: {}]
  %s2 = inlined_call_operand.hbm [shape: f32[2,32], index: 2, kind: output, shape index: {}]
  %s3 = sld [smem:[#allocation0]]
  $region26: #{tpu_custom_call.1} parent=0
    _
  %s5 = ssub.s32 1, %s3
  %s6 = scalar_select 0, %s5, %s3
  $region1: #{tpu_custom_call.1} parent=0
    #allocation4 [shape = 'u8[1024]{0}', space=vmem, size = 0x400, scoped, tag = 'output window, operand 0, single buffered']
    #allocation5 [shape = 's32[1]{0}', space=sflag, size = 0x4, scoped, tag = 'scoped memory for tpu_custom_call.1']
    %7 = vsyncpa [#allocation5], 0
    // Predicated region
    $region2: #{tpu_custom_call.1} parent=1 // pred_check
      _
    $region3: #{tpu_custom_call.1} parent=1 // pred_check_branch
      %9 = sbr.rel (0) target = $region5
    $region4: #{tpu_custom_call.1} parent=1 // pred_region
      _
    $region5: #{tpu_custom_call.1} parent=1 // pred_fallthru
      _
    // Predicated region
    $region6: #{tpu_custom_call.1} parent=1 // pred_check
      _
    $region7: #{tpu_custom_call.1} parent=1 // pred_check_branch
      %11 = sbr.rel (0) target = $region9
    $region8: #{tpu_custom_call.1} parent=1 // pred_region
      _
    $region9: #{tpu_custom_call.1} parent=1 // pred_fallthru
      _
    %p12 = scmp.eq.s32.totalorder 0, 0
    // Predicated region
    $region10: #{tpu_custom_call.1} parent=1 // pred_check
      %p13 = pneg %p12
    $region11: #{tpu_custom_call.1} parent=1 // pred_check_branch
      %15 = sbr.rel (%p13) target = $region13
    $region12: #{tpu_custom_call.1} parent=1 // pred_region
      %vm16 = vcmask 254976
      %17 = vst.msk [vmem:[#allocation2] sm:$0x3] %vm16, 0.0
      %18 = vst.msk [vmem:[#allocation3] sm:$0x3] %vm16, 0.0
    $region13: #{tpu_custom_call.1} parent=1 // pred_fallthru
      _
    %v19 = vld [vmem:[%s0] sm:$0xff]
    %v20 = vld [vmem:[%s0 + $0x8] sm:$0xff]
    %v21 = vld [vmem:[%s1] sm:$0xff]
    %v22 = vld [vmem:[%s1 + $0x8] sm:$0xff]
    %vm23 = vcmp.ne.f32.partialorder %v21, 0.0
    %vm24 = vcmp.ne.f32.partialorder %v22, 0.0
    %v25 = vsel %vm23, 1, 0
    %v26 = vsel %vm24, 1, 0
    %27 = vset.pattern.permute.xlu0 0
    %28 = vperm.xlu0 %27, %v25
    %v29 = vpop.permute.xlu0 %28
    %30 = vset.pattern.permute.xlu0 0
    %31 = vperm.xlu0 %30, %v26
    %v32 = vpop.permute.xlu0 %31
    %vm33 = vcmp.eq.s32.totalorder %v29, 1
    %vm34 = vcmp.eq.s32.totalorder %v32, 1
    %v35 = vsel %vm33, 0.0, %v19
    %v36 = vsel %vm34, 0.0, %v20
    %v37 = vld [vmem:[#allocation2] sm:$0x3]
    %vm38 = vcmask 261120
    %v39 = vsel %vm38, %v35, 0.0
    %v40 = vrot.slane %v39, 4
    %v41 = vadd.f32 %v39, %v40
    %v42 = vrot.slane %v41, 2
    %v43 = vadd.f32 %v41, %v42
    %v44 = vrot.slane %v43, 1
    %v45 = vadd.f32 %v43, %v44
    %v46 = vsel %vm38, %v36, 0.0
    %v47 = vrot.slane %v46, 4
    %v48 = vadd.f32 %v46, %v47
    %v49 = vrot.slane %v48, 2
    %v50 = vadd.f32 %v48, %v49
    %v51 = vrot.slane %v50, 1
    %v52 = vadd.f32 %v50, %v51
    %vm55 = vcmask 1041409
    %v56 = vsel %vm55, %v52, %v45
    %v58 = vadd.f32 %v37, %v56
    %vm59 = vcmask 254976
    %60 = vst.msk [vmem:[#allocation2] sm:$0x3] %vm59, %v58
    %v61 = vld [vmem:[#allocation3] sm:$0x3]
    %v62 = vmul.f32 %v35, %v35
    %v63 = vmul.f32 %v36, %v36
    %v64 = vsel %vm38, %v62, 0.0
    %v65 = vrot.slane %v64, 4
    %v66 = vadd.f32 %v64, %v65
    %v67 = vrot.slane %v66, 2
    %v68 = vadd.f32 %v66, %v67
    %v69 = vrot.slane %v68, 1
    %v70 = vadd.f32 %v68, %v69
    %v71 = vsel %vm38, %v63, 0.0
    %v72 = vrot.slane %v71, 4
    %v73 = vadd.f32 %v71, %v72
    %v74 = vrot.slane %v73, 2
    %v75 = vadd.f32 %v73, %v74
    %v76 = vrot.slane %v75, 1
    %v77 = vadd.f32 %v75, %v76
    %v80 = vsel %vm55, %v77, %v70
    %v82 = vadd.f32 %v61, %v80
    %83 = vst.msk [vmem:[#allocation3] sm:$0x3] %vm59, %v82
    // Predicated region
    $region14: #{tpu_custom_call.1} parent=1 // pred_check
      %p84 = pneg %p12
    $region15: #{tpu_custom_call.1} parent=1 // pred_check_branch
      %86 = sbr.rel (%p84) target = $region17
    $region16: #{tpu_custom_call.1} parent=1 // pred_region
      %v87 = vld [vmem:[#allocation2] sm:$0x3]
      %v88 = vmul.f32 %v87, %v87
      %v89 = vld [vmem:[#allocation3] sm:$0x3]
      %v90 = vsub.f32 %v88, %v89
      %v91 = vmul.f32 %v90, 0.5
      %92 = vst.msk [vmem:[#allocation4] sm:$0x3] %vm59, %v91
    $region17: #{tpu_custom_call.1} parent=1 // pred_fallthru
      _
    // Predicated region
    $region18: #{tpu_custom_call.1} parent=1 // pred_check
      _
    $region19: #{tpu_custom_call.1} parent=1 // pred_check_branch
      %94 = sbr.rel (0) target = $region21
    $region20: #{tpu_custom_call.1} parent=1 // pred_region
      %s96 = ssub.s32 32, 32
      %97 = vsyncadd [#allocation5], %s96
      %s99 = sshll.u32 [#allocation4], 4
      %s100 = int_to_ptr.vmem [resolvable:$true] %s99
      %102 = dma.vmem_to_hbm [thread:$0]  %s100, 32, %s2, [#allocation5]
    $region21: #{tpu_custom_call.1} parent=1 // pred_fallthru
      _
    // Predicated region
    $region22: #{tpu_custom_call.1} parent=1 // pred_check
      _
    $region23: #{tpu_custom_call.1} parent=1 // pred_check_branch
      %104 = sbr.rel (0) target = $region25
    $region24: #{tpu_custom_call.1} parent=1 // pred_region
      %105 = dma.done [#allocation5], 32
    $region25: #{tpu_custom_call.1} parent=1 // pred_fallthru
      _
    %106 = vsyncpa [#allocation5], 1

</llo_original>
